<compile_context>
chip_gen: v7x
topology: tpu7x:2x2x1
jax: 0.10.0
libtpu: 0.0.40
codegen_flags: <defaults>
</compile_context>

<pallas_src>
import functools

import jax
import jax.numpy as jnp
from jax import lax
from jax.experimental import pallas as pl
from jax.experimental.pallas import tpu as pltpu


def _attention_kernel(x_ref, wp_ref, bp_ref, wo_ref, bo_ref, o_ref,
                      *, n_heads, d_k, j_tile):
    # x_ref / o_ref: (1, C, S) lane-dense blocks; weights are full VMEM blocks.
    x = x_ref[0]                                              # (C, S) f32
    S = x.shape[-1]

    # qkv^T = Wp^T @ x^T + bp^T  -> (3*HD, S).  Softmax scale is already
    # folded into the q rows of Wp / bp by the wrapper.  K = C is tiny, keep f32.
    qkv = jnp.dot(wp_ref[...], x,
                  preferred_element_type=jnp.float32) + bp_ref[...]

    acc = None
    num_chunks = S // j_tile
    for h in range(n_heads):                                  # small static loop
        off = h * 3 * d_k
        q = qkv[off:off + d_k, :]                             # (d_k, S), scaled
        k = qkv[off + d_k:off + 2 * d_k, :]                   # (d_k, S)
        v = qkv[off + 2 * d_k:off + 3 * d_k, :]               # (d_k, S)

        # res_t[d, i] = sum_j v[d, j] / denom[j] * e[i, j], accumulated over
        # j-chunks (normalization is per key-column j, so chunking is exact).
        res_t = jnp.zeros((d_k, S), jnp.float32)
        for c in range(num_chunks):                           # static (1 at S=256)
            j0 = c * j_tile
            k_c = k[:, j0:j0 + j_tile]                        # (d_k, j_tile)
            v_c = v[:, j0:j0 + j_tile]                        # (d_k, j_tile)

            # scores[i, j] = sum_d q[d, i] * k_c[d, j]  (contract d_k, axis 0).
            # K = d_k = 4 -> f32 operands cost nothing extra on the MXU.
            scores = lax.dot_general(
                q, k_c,
                dimension_numbers=(((0,), (0,)), ((), ())),
                preferred_element_type=jnp.float32)           # (S_i, j_tile)

            # PyTorch softmax(dim=1) on (b, i, j, h) == softmax over the query
            # axis i, i.e. axis 0 (column-wise) of this (S_i, j_tile) matrix.
            m = jnp.max(scores, axis=0, keepdims=True)        # (1, j_tile)
            e = jnp.exp(scores - m)                           # (S_i, j_tile) f32
            denom = jnp.sum(e, axis=0, keepdims=True)         # (1, j_tile)

            # Fold 1/denom into the tiny v slice (1 vreg) instead of the
            # (S, j_tile) matrix; reciprocal goes to the EUP slot.
            v_s = v_c * pl.reciprocal(denom, approx=True)     # (d_k, j_tile)

            # res_t += v_s @ e^T  (contract key axis j; K = j_tile -> bf16 MXU,
            # f32 accumulation).
            res_t = res_t + lax.dot_general(
                v_s.astype(jnp.bfloat16), e.astype(jnp.bfloat16),
                dimension_numbers=(((1,), (1,)), ((), ())),
                preferred_element_type=jnp.float32)           # (d_k, S_i)

        # Fold this head's slice of the output projection in directly
        # (accumulate into one f32 accumulator; no concat of head outputs).
        contrib = jnp.dot(wo_ref[:, h * d_k:(h + 1) * d_k], res_t,
                          preferred_element_type=jnp.float32)  # (C, S)
        acc = contrib if acc is None else acc + contrib

    o_ref[0] = (acc + bo_ref[...] + x).astype(o_ref.dtype)    # bias + residual


def attention_block_pallas(x_nchw, params, *, n_heads, d_k, j_tile=None):
    """x_nchw: (B, C, H, W) float32. Returns (B, C, H, W)."""
    B, C, H, W = x_nchw.shape
    S = H * W
    HD = n_heads * d_k
    scale = float(d_k) ** -0.5

    if j_tile is None:
        j_tile = min(S, 512)
    assert S % j_tile == 0

    w_proj, b_proj, w_out, b_out = params  # (C,3HD), (1,3HD), (HD,C), (1,C)

    # Transposed weights for the lane-dense math; fold the softmax scale into
    # the q rows of the projection so the scores never need an extra
    # elementwise multiply inside the kernel.
    col = jnp.arange(3 * HD) % (3 * d_k)
    qscale = jnp.where(col < d_k, jnp.float32(scale), jnp.float32(1.0))
    wp_t = (w_proj.T * qscale[:, None]).astype(jnp.float32)   # (3HD, C)
    bp_t = (b_proj.T * qscale[:, None]).astype(jnp.float32)   # (3HD, 1)
    wo_t = w_out.T.astype(jnp.float32)                        # (C, HD)
    bo_t = b_out.T.astype(jnp.float32)                        # (C, 1)

    # NCHW -> (B, C, S) is a free reshape (no HBM transpose passes).
    x_bcs = x_nchw.reshape(B, C, S)

    kernel = functools.partial(_attention_kernel,
                               n_heads=n_heads, d_k=d_k, j_tile=j_tile)

    out_bcs = pl.pallas_call(
        kernel,
        out_shape=jax.ShapeDtypeStruct((B, C, S), jnp.float32),
        grid_spec=pltpu.PrefetchScalarGridSpec(
            num_scalar_prefetch=0,
            grid=(B,),                                        # one image / step
            in_specs=[
                pl.BlockSpec((1, C, S), lambda b: (b, 0, 0)),
                pl.BlockSpec((3 * HD, C), lambda b: (0, 0)),
                pl.BlockSpec((3 * HD, 1), lambda b: (0, 0)),
                pl.BlockSpec((C, HD), lambda b: (0, 0)),
                pl.BlockSpec((C, 1), lambda b: (0, 0)),
            ],
            out_specs=pl.BlockSpec((1, C, S), lambda b: (b, 0, 0)),
        ),
        compiler_params=pltpu.CompilerParams(
            dimension_semantics=("parallel",)),
    )(x_bcs, wp_t, bp_t, wo_t, bo_t)

    # (B, C, S) -> NCHW (free reshape).
    return out_bcs.reshape(B, C, H, W)


def attention_block_ref(x_nchw, params, *, n_heads, d_k):
    """Pure-JAX (all-f32) reference matching the PyTorch forward exactly."""
    B, C, H, W = x_nchw.shape
    scale = float(d_k) ** -0.5
    w_proj, b_proj, w_out, b_out = params
    x = jnp.transpose(x_nchw.reshape(B, C, -1), (0, 2, 1))          # (B, S, C)
    qkv = (x @ w_proj + b_proj[0]).reshape(B, -1, n_heads, 3 * d_k)
    q, k, v = jnp.split(qkv, 3, axis=-1)
    attn = jnp.einsum('bihd,bjhd->bijh', q, k) * scale
    attn = jax.nn.softmax(attn, axis=1)
    res = jnp.einsum('bijh,bjhd->bihd', attn, v)
    res = res.reshape(B, -1, n_heads * d_k)
    res = res @ w_out + b_out[0]
    res = res + x
    return jnp.transpose(res, (0, 2, 1)).reshape(B, C, H, W)


if __name__ == "__main__":
    # Module config: n_channels=4, n_heads=1, d_k=None -> d_k=4, n_groups=1.
    n_channels, n_heads = 4, 1
    d_k = n_channels
    B, H, W = 2, 16, 16

    key = jax.random.PRNGKey(0)
    kx, kwp, kbp, kwo, kbo = jax.random.split(key, 5)

    x = jax.random.normal(kx, (B, n_channels, H, W), dtype=jnp.float32)

    HD = n_heads * d_k
    # Deterministic synthetic parameters (Linear stored as (in, out) for x @ W).
    w_proj = jax.random.normal(kwp, (n_channels, 3 * HD), jnp.float32) * 0.1
    b_proj = jax.random.normal(kbp, (1, 3 * HD), jnp.float32) * 0.1
    w_out = jax.random.normal(kwo, (HD, n_channels), jnp.float32) * 0.1
    b_out = jax.random.normal(kbo, (1, n_channels), jnp.float32) * 0.1
    params = (w_proj, b_proj, w_out, b_out)

    out = attention_block_pallas(x, params, n_heads=n_heads, d_k=d_k)
    out = jax.block_until_ready(out)

    ref = attention_block_ref(x, params, n_heads=n_heads, d_k=d_k)
    assert out.shape == (B, n_channels, H, W)
    # Kernel uses f32 scores/softmax, approx-reciprocal denominator and a bf16
    # e@v MXU matmul (f32 accumulation); compare against the all-f32 reference
    # with a correspondingly relaxed tolerance.
    assert jnp.allclose(out, ref, atol=2e-3, rtol=2e-3), "mismatch vs reference"

    print("KERNEL_OK")
</pallas_src>

<mosaic_0001>
module attributes {stable_mosaic.version = 11 : i64} {
  func.func @_attention_kernel(%arg0: i32, %arg1: memref<1x4x256xf32, #tpu.memory_space<vmem>>, %arg2: memref<12x4xf32, #tpu.memory_space<vmem>>, %arg3: memref<12x1xf32, #tpu.memory_space<vmem>>, %arg4: memref<4x4xf32, #tpu.memory_space<vmem>>, %arg5: memref<4x1xf32, #tpu.memory_space<vmem>>, %arg6: memref<1x4x256xf32, #tpu.memory_space<vmem>>) attributes {dimension_semantics = [#tpu.dimension_semantics<parallel>], iteration_bounds = array<i64: 2>, scalar_prefetch = 0 : i64, scratch_operands = 0 : i64, tpu.core_type = #tpu.core_type<tc>, window_params = [{transform_indices = @transform_0, window_bounds = array<i64: 1, 4, 256>}, {pipeline_mode = #tpu.pipeline_mode<synchronous>, transform_indices = @transform_1, window_bounds = array<i64: 12, 4>}, {pipeline_mode = #tpu.pipeline_mode<synchronous>, transform_indices = @transform_2, window_bounds = array<i64: 12, 1>}, {pipeline_mode = #tpu.pipeline_mode<synchronous>, transform_indices = @transform_3, window_bounds = array<i64: 4, 4>}, {pipeline_mode = #tpu.pipeline_mode<synchronous>, transform_indices = @transform_4, window_bounds = array<i64: 4, 1>}, {transform_indices = @transform_5, window_bounds = array<i64: 1, 4, 256>}]} {
    %c0 = arith.constant 0 : index
    %c0_0 = arith.constant 0 : index
    %c0_1 = arith.constant 0 : index
    %0 = vector.load %arg1[%c0, %c0_0, %c0_1] : memref<1x4x256xf32, #tpu.memory_space<vmem>>, vector<1x4x256xf32>
    %1 = vector.shape_cast %0 : vector<1x4x256xf32> to vector<4x256xf32>
    %c0_2 = arith.constant 0 : index
    %c0_3 = arith.constant 0 : index
    %2 = vector.load %arg2[%c0_2, %c0_3] : memref<12x4xf32, #tpu.memory_space<vmem>>, vector<12x4xf32>
    %cst = arith.constant dense<0.000000e+00> : vector<12x256xf32>
    %3 = tpu.matmul %2, %1, %cst {dimension_numbers = #tpu.dot_dimension_numbers<[1], [0], [0], [1], [0, 0, 1, 1], [], []>} : vector<12x4xf32>, vector<4x256xf32>, vector<12x256xf32> -> vector<12x256xf32>
    %c0_4 = arith.constant 0 : index
    %c0_5 = arith.constant 0 : index
    %4 = vector.load %arg3[%c0_4, %c0_5] : memref<12x1xf32, #tpu.memory_space<vmem>>, vector<12x1xf32>
    %5 = vector.broadcast %4 : vector<12x1xf32> to vector<12x256xf32>
    %6 = arith.addf %3, %5 : vector<12x256xf32>
    %7 = vector.extract_strided_slice %6 {offsets = [0, 0], sizes = [4, 256], strides = [1, 1]} : vector<12x256xf32> to vector<4x256xf32>
    %8 = vector.extract_strided_slice %6 {offsets = [4, 0], sizes = [4, 256], strides = [1, 1]} : vector<12x256xf32> to vector<4x256xf32>
    %9 = vector.extract_strided_slice %6 {offsets = [8, 0], sizes = [4, 256], strides = [1, 1]} : vector<12x256xf32> to vector<4x256xf32>
    %cst_6 = arith.constant 0.000000e+00 : f32
    %10 = vector.broadcast %cst_6 : f32 to vector<4x256xf32>
    %cst_7 = arith.constant dense<0.000000e+00> : vector<256x256xf32>
    %11 = tpu.matmul %7, %8, %cst_7 {dimension_numbers = #tpu.dot_dimension_numbers<[0], [0], [1], [1], [0, 1, 1, 1], [], []>} : vector<4x256xf32>, vector<4x256xf32>, vector<256x256xf32> -> vector<256x256xf32>
    %cst_8 = arith.constant dense<0xFF800000> : vector<256xf32>
    %12 = vector.multi_reduction <maximumf>, %11, %cst_8 [0] : vector<256x256xf32> to vector<256xf32>
    %13 = vector.shape_cast %12 : vector<256xf32> to vector<1x256xf32>
    %14 = vector.broadcast %13 : vector<1x256xf32> to vector<256x256xf32>
    %15 = arith.subf %11, %14 : vector<256x256xf32>
    %16 = math.exp %15 : vector<256x256xf32>
    %cst_9 = arith.constant dense<0.000000e+00> : vector<256xf32>
    %17 = vector.multi_reduction <add>, %16, %cst_9 [0] : vector<256x256xf32> to vector<256xf32>
    %18 = vector.shape_cast %17 : vector<256xf32> to vector<1x256xf32>
    %19 = tpu.reciprocal %18 {approx = true} : vector<1x256xf32> -> vector<1x256xf32>
    %20 = vector.broadcast %19 : vector<1x256xf32> to vector<4x256xf32>
    %21 = arith.mulf %9, %20 : vector<4x256xf32>
    %22 = arith.truncf %21 : vector<4x256xf32> to vector<4x256xbf16>
    %23 = arith.truncf %16 : vector<256x256xf32> to vector<256x256xbf16>
    %cst_10 = arith.constant dense<0.000000e+00> : vector<4x256xf32>
    %24 = tpu.matmul %22, %23, %cst_10 {dimension_numbers = #tpu.dot_dimension_numbers<[1], [1], [0], [0], [0, 0, 1, 0], [], []>} : vector<4x256xbf16>, vector<256x256xbf16>, vector<4x256xf32> -> vector<4x256xf32>
    %25 = arith.addf %10, %24 : vector<4x256xf32>
    %c0_11 = arith.constant 0 : index
    %c0_12 = arith.constant 0 : index
    %26 = vector.load %arg4[%c0_11, %c0_12] : memref<4x4xf32, #tpu.memory_space<vmem>>, vector<4x4xf32>
    %cst_13 = arith.constant dense<0.000000e+00> : vector<4x256xf32>
    %27 = tpu.matmul %26, %25, %cst_13 {dimension_numbers = #tpu.dot_dimension_numbers<[1], [0], [0], [1], [0, 0, 1, 1], [], []>} : vector<4x4xf32>, vector<4x256xf32>, vector<4x256xf32> -> vector<4x256xf32>
    %c0_14 = arith.constant 0 : index
    %c0_15 = arith.constant 0 : index
    %28 = vector.load %arg5[%c0_14, %c0_15] : memref<4x1xf32, #tpu.memory_space<vmem>>, vector<4x1xf32>
    %29 = vector.broadcast %28 : vector<4x1xf32> to vector<4x256xf32>
    %30 = arith.addf %27, %29 : vector<4x256xf32>
    %31 = arith.addf %30, %1 : vector<4x256xf32>
    %c0_16 = arith.constant 0 : index
    %c0_17 = arith.constant 0 : index
    %c0_18 = arith.constant 0 : index
    %32 = vector.load %arg6[%c0_16, %c0_17, %c0_18] : memref<1x4x256xf32, #tpu.memory_space<vmem>>, vector<1x4x256xf32>
    %33 = vector.shape_cast %32 : vector<1x4x256xf32> to vector<4x256xf32>
    %34 = vector.shape_cast %31 : vector<4x256xf32> to vector<1x4x256xf32>
    tpu.vector_store %arg6[%c0_16, %c0_17, %c0_18], %34 {strides = array<i32>} : memref<1x4x256xf32, #tpu.memory_space<vmem>>, vector<1x4x256xf32>,
    return
  }
  func.func @transform_0(%arg0: i32) -> (i32, i32, i32) {
    %c0_i32 = arith.constant 0 : i32
    %c0_i32_0 = arith.constant 0 : i32
    %c0_i32_1 = arith.constant 0 : i32
    return %arg0, %c0_i32, %c0_i32_0 : i32, i32, i32
  }
  func.func @transform_1(%arg0: i32) -> (i32, i32) {
    %c0_i32 = arith.constant 0 : i32
    %c0_i32_0 = arith.constant 0 : i32
    %c0_i32_1 = arith.constant 0 : i32
    return %c0_i32, %c0_i32_0 : i32, i32
  }
  func.func @transform_2(%arg0: i32) -> (i32, i32) {
    %c0_i32 = arith.constant 0 : i32
    %c0_i32_0 = arith.constant 0 : i32
    %c0_i32_1 = arith.constant 0 : i32
    return %c0_i32, %c0_i32_0 : i32, i32
  }
  func.func @transform_3(%arg0: i32) -> (i32, i32) {
    %c0_i32 = arith.constant 0 : i32
    %c0_i32_0 = arith.constant 0 : i32
    %c0_i32_1 = arith.constant 0 : i32
    return %c0_i32, %c0_i32_0 : i32, i32
  }
  func.func @transform_4(%arg0: i32) -> (i32, i32) {
    %c0_i32 = arith.constant 0 : i32
    %c0_i32_0 = arith.constant 0 : i32
    %c0_i32_1 = arith.constant 0 : i32
    return %c0_i32, %c0_i32_0 : i32, i32
  }
  func.func @transform_5(%arg0: i32) -> (i32, i32, i32) {
    %c0_i32 = arith.constant 0 : i32
    %c0_i32_0 = arith.constant 0 : i32
    %c0_i32_1 = arith.constant 0 : i32
    return %arg0, %c0_i32, %c0_i32_0 : i32, i32, i32
  }
}

</mosaic_0001>

<llo_original>
// kernel: tpu_custom_call.1
$region0: #{tpu_custom_call.1}
  #allocation0 [shape = 'u32[]', space=smem, size = 0x4, offset = 0x4, fixed_abs, tag = 'smem constant byte address 0x4 - core index']
  #allocation1 [shape = 'u32[144,128]{1,0:T(1,128)}', space=vmem, size = 0x12000, scoped, tag = 'internal scratch']
  %s0 = inlined_call_operand.vmem [shape: f32[2,4,256], index: 0, kind: input, shape index: {}]
  %s1 = inlined_call_operand.vmem [shape: f32[12,4], index: 1, kind: input, shape index: {}]
  %s2 = inlined_call_operand.vmem [shape: f32[12,1], index: 2, kind: input, shape index: {}]
  %s3 = inlined_call_operand.vmem [shape: f32[4,4], index: 3, kind: input, shape index: {}]
  %s4 = inlined_call_operand.vmem [shape: f32[4,1], index: 4, kind: input, shape index: {}]
  %s5 = inlined_call_operand.hbm [shape: f32[2,4,256], index: 5, kind: output, shape index: {}]
  %s6 = sld [smem:[#allocation0]]
  $region53: #{tpu_custom_call.1} parent=0
    _
  %s8 = ssub.s32 1, %s6
  %s9 = scalar_select 0, %s8, %s6
  $region1: #{tpu_custom_call.1} parent=0
    #allocation2 [shape = 'u8[8192]{0}', space=vmem, size = 0x2000, scoped, tag = 'output window, operand 0']
    #allocation3 [shape = 's32[2]{0}', space=sflag, size = 0x8, scoped, tag = 'scoped memory for tpu_custom_call.1']
    %10 = vsyncpa [#allocation3], 0
    %s11 = scalar_lea.sflag [#allocation3], 1
    %12 = vsyncpa %s11, 0
    loop: start=0, step=1, limit=4
    $region2: #{tpu_custom_call.1} parent=1 // loop_pre_header
      _
    $region3: #{tpu_custom_call.1} parent=1 // loop_header
      %s14 = sphi 0, %s18
      %p15 = scmp.ge.s32.totalorder %s14, 4
      %s24 = sphi 0, %s26
      %s27 = sphi 0, %s24
      %s28 = sphi 0, %s27
      %s44 = sphi 0, %s28
      %s48 = sphi 0, %s48
      %s50 = sphi 0, %s48
      %s51 = sphi 0, %s50
      %s65 = sphi 0, %s51
      %s69 = sphi 0, %s69
      %s71 = sphi 0, %s69
      %s72 = sphi 0, %s71
      %s86 = sphi 0, %s72
      %s90 = sphi 0, %s90
      %s92 = sphi 0, %s90
      %s93 = sphi 0, %s92
      %s107 = sphi 0, %s93
      %s111 = sphi 0, %s111
      %s113 = sphi 0, %s111
      %s114 = sphi 0, %s113
      %s128 = sphi 0, %s114
      %s134 = sphi 0, %s136
      %s137 = sphi 0, %s134
      %s138 = sphi 0, %s137
      %s154 = sphi 0, %s138
    $region4: #{tpu_custom_call.1} parent=1 // loop_header_branch
      %17 = sbr.rel (%p15) target = $region8
    $region5: #{tpu_custom_call.1} parent=1 // loop_body
      %s19 = ssub.s32 %s14, 1
      %s20 = ssub.s32 %s14, 2
      %s21 = sadd.s32 %s14, 1
      %s22 = ssub.s32 %s14, %s21
      %p23 = scmp.eq.s32.totalorder %s22, 0
      %s25 = sadd.s32 %s24, 1
      %s26 = scalar_select %p23, %s24, %s25
      %p29 = pneg %p23
      %p30 = scmp.eq.s32.totalorder %s14, 1
      %p31 = por %p29, %p30
      %p32 = scmp.ne.s32.totalorder %s24, %s27
      %p33 = scmp.eq.s32.totalorder %s14, 0
      %p34 = por %p32, %p33
      %p35 = scmp.ne.s32.totalorder %s24, %s27
      %p36 = scmp.eq.s32.totalorder %s19, 1
      %p37 = por %p35, %p36
      %p38 = scmp.ne.s32.totalorder %s27, %s28
      %p39 = scmp.eq.s32.totalorder %s19, 0
      %p40 = por %p38, %p39
      %p41 = scmp.ne.s32.totalorder %s27, %s28
      %p42 = scmp.eq.s32.totalorder %s20, 1
      %p43 = por %p41, %p42
      %p45 = scmp.ne.s32.totalorder %s28, %s44
      %p46 = scmp.eq.s32.totalorder %s20, 0
      %p47 = por %p45, %p46
      %s49 = sadd.s32 %s48, 1
      %p52 = scmp.eq.s32.totalorder %s14, 1
      %p53 = scmp.ne.s32.totalorder %s48, %s50
      %p54 = scmp.eq.s32.totalorder %s14, 0
      %p55 = por %p53, %p54
      %p56 = scmp.ne.s32.totalorder %s48, %s50
      %p57 = scmp.eq.s32.totalorder %s19, 1
      %p58 = por %p56, %p57
      %p59 = scmp.ne.s32.totalorder %s50, %s51
      %p60 = scmp.eq.s32.totalorder %s19, 0
      %p61 = por %p59, %p60
      %p62 = scmp.ne.s32.totalorder %s50, %s51
      %p63 = scmp.eq.s32.totalorder %s20, 1
      %p64 = por %p62, %p63
      %p66 = scmp.ne.s32.totalorder %s51, %s65
      %p67 = scmp.eq.s32.totalorder %s20, 0
      %p68 = por %p66, %p67
      %s70 = sadd.s32 %s69, 1
      %p73 = scmp.eq.s32.totalorder %s14, 1
      %p74 = scmp.ne.s32.totalorder %s69, %s71
      %p75 = scmp.eq.s32.totalorder %s14, 0
      %p76 = por %p74, %p75
      %p77 = scmp.ne.s32.totalorder %s69, %s71
      %p78 = scmp.eq.s32.totalorder %s19, 1
      %p79 = por %p77, %p78
      %p80 = scmp.ne.s32.totalorder %s71, %s72
      %p81 = scmp.eq.s32.totalorder %s19, 0
      %p82 = por %p80, %p81
      %p83 = scmp.ne.s32.totalorder %s71, %s72
      %p84 = scmp.eq.s32.totalorder %s20, 1
      %p85 = por %p83, %p84
      %p87 = scmp.ne.s32.totalorder %s72, %s86
      %p88 = scmp.eq.s32.totalorder %s20, 0
      %p89 = por %p87, %p88
      %s91 = sadd.s32 %s90, 1
      %p94 = scmp.eq.s32.totalorder %s14, 1
      %p95 = scmp.ne.s32.totalorder %s90, %s92
      %p96 = scmp.eq.s32.totalorder %s14, 0
      %p97 = por %p95, %p96
      %p98 = scmp.ne.s32.totalorder %s90, %s92
      %p99 = scmp.eq.s32.totalorder %s19, 1
      %p100 = por %p98, %p99
      %p101 = scmp.ne.s32.totalorder %s92, %s93
      %p102 = scmp.eq.s32.totalorder %s19, 0
      %p103 = por %p101, %p102
      %p104 = scmp.ne.s32.totalorder %s92, %s93
      %p105 = scmp.eq.s32.totalorder %s20, 1
      %p106 = por %p104, %p105
      %p108 = scmp.ne.s32.totalorder %s93, %s107
      %p109 = scmp.eq.s32.totalorder %s20, 0
      %p110 = por %p108, %p109
      %s112 = sadd.s32 %s111, 1
      %p115 = scmp.eq.s32.totalorder %s14, 1
      %p116 = scmp.ne.s32.totalorder %s111, %s113
      %p117 = scmp.eq.s32.totalorder %s14, 0
      %p118 = por %p116, %p117
      %p119 = scmp.ne.s32.totalorder %s111, %s113
      %p120 = scmp.eq.s32.totalorder %s19, 1
      %p121 = por %p119, %p120
      %p122 = scmp.ne.s32.totalorder %s113, %s114
      %p123 = scmp.eq.s32.totalorder %s19, 0
      %p124 = por %p122, %p123
      %p125 = scmp.ne.s32.totalorder %s113, %s114
      %p126 = scmp.eq.s32.totalorder %s20, 1
      %p127 = por %p125, %p126
      %p129 = scmp.ne.s32.totalorder %s114, %s128
      %p130 = scmp.eq.s32.totalorder %s20, 0
      %p131 = por %p129, %p130
      %s132 = ssub.s32 %s14, %s21
      %p133 = scmp.eq.s32.totalorder %s132, 0
      %s135 = sadd.s32 %s134, 1
      %s136 = scalar_select %p133, %s134, %s135
      %p139 = pneg %p133
      %p140 = scmp.eq.s32.totalorder %s14, 1
      %p141 = por %p139, %p140
      %p142 = scmp.ne.s32.totalorder %s134, %s137
      %p143 = scmp.eq.s32.totalorder %s14, 0
      %p144 = por %p142, %p143
      %p145 = scmp.ne.s32.totalorder %s134, %s137
      %p146 = scmp.eq.s32.totalorder %s19, 1
      %p147 = por %p145, %p146
      %p148 = scmp.ne.s32.totalorder %s137, %s138
      %p149 = scmp.eq.s32.totalorder %s19, 0
      %p150 = por %p148, %p149
      %p151 = scmp.ne.s32.totalorder %s137, %s138
      %p152 = scmp.eq.s32.totalorder %s20, 1
      %p153 = por %p151, %p152
      %p155 = scmp.ne.s32.totalorder %s138, %s154
      %p156 = scmp.eq.s32.totalorder %s20, 0
      %p157 = por %p155, %p156
      %p158 = scmp.le.s32.totalorder 1, %s14
      %p159 = scmp.lt.s32.totalorder %s14, 3
      %p160 = pnand %p158, %p159
      %p161 = pneg %p160
      // Predicated region
      $region9: #{tpu_custom_call.1} parent=5 // pred_check
        _
      $region10: #{tpu_custom_call.1} parent=5 // pred_check_branch
        %163 = sbr.rel (%p160) target = $region12
      $region11: #{tpu_custom_call.1} parent=5 // pred_region
        %s164 = ssub.s32 %s14, 1
        // Predicated region
        $region13: #{tpu_custom_call.1} parent=11 // pred_check
          %p165 = pneg %p61
        $region14: #{tpu_custom_call.1} parent=11 // pred_check_branch
          %167 = sbr.rel (%p165) target = $region16
        $region15: #{tpu_custom_call.1} parent=11 // pred_region
          _
        $region16: #{tpu_custom_call.1} parent=11 // pred_fallthru
          _
        // Predicated region
        $region17: #{tpu_custom_call.1} parent=11 // pred_check
          %p168 = pneg %p82
        $region18: #{tpu_custom_call.1} parent=11 // pred_check_branch
          %170 = sbr.rel (%p168) target = $region20
        $region19: #{tpu_custom_call.1} parent=11 // pred_region
          _
        $region20: #{tpu_custom_call.1} parent=11 // pred_fallthru
          _
        // Predicated region
        $region21: #{tpu_custom_call.1} parent=11 // pred_check
          %p171 = pneg %p103
        $region22: #{tpu_custom_call.1} parent=11 // pred_check_branch
          %173 = sbr.rel (%p171) target = $region24
        $region23: #{tpu_custom_call.1} parent=11 // pred_region
          _
        $region24: #{tpu_custom_call.1} parent=11 // pred_fallthru
          _
        // Predicated region
        $region25: #{tpu_custom_call.1} parent=11 // pred_check
          %p174 = pneg %p124
        $region26: #{tpu_custom_call.1} parent=11 // pred_check_branch
          %176 = sbr.rel (%p174) target = $region28
        $region27: #{tpu_custom_call.1} parent=11 // pred_region
          _
        $region28: #{tpu_custom_call.1} parent=11 // pred_fallthru
          _
      $region12: #{tpu_custom_call.1} parent=5 // pred_fallthru
        _
      %p177 = scmp.lt.s32.totalorder %s14, 2
      // Predicated region
      $region29: #{tpu_custom_call.1} parent=5 // pred_check
        %p178 = pneg %p177
      $region30: #{tpu_custom_call.1} parent=5 // pred_check_branch
        %180 = sbr.rel (%p178) target = $region32
      $region31: #{tpu_custom_call.1} parent=5 // pred_region
        // Predicated region
        $region33: #{tpu_custom_call.1} parent=31 // pred_check
          %p181 = pneg %p34
        $region34: #{tpu_custom_call.1} parent=31 // pred_check_branch
          %183 = sbr.rel (%p181) target = $region36
        $region35: #{tpu_custom_call.1} parent=31 // pred_region
          %p184 = scmp.lt.s32.totalorder %s14, 1
          %s185 = scalar_select %p184, %s14, 1
          %s186 = smul.addr %s185, 2
          %s187 = smul.addr %s186, 4
          %s188 = scalar_lea.vmem %s0, %s187
        $region36: #{tpu_custom_call.1} parent=31 // pred_fallthru
          _
      $region32: #{tpu_custom_call.1} parent=5 // pred_fallthru
        _
      %p189 = scmp.le.s32.totalorder 1, %s14
      %p190 = scmp.lt.s32.totalorder %s14, 3
      %p191 = pnand %p189, %p190
      %p192 = pneg %p191
      // Predicated region
      $region37: #{tpu_custom_call.1} parent=5 // pred_check
        _
      $region38: #{tpu_custom_call.1} parent=5 // pred_check_branch
        %194 = sbr.rel (%p191) target = $region40
      $region39: #{tpu_custom_call.1} parent=5 // pred_region
        %s195 = ssub.s32 %s14, 1
        %p196 = scmp.lt.s32.totalorder %s19, 1
        %s197 = scalar_select %p196, %s19, 1
        %s198 = smul.addr %s197, 2
        %s199 = smul.addr %s198, 4
        %s200 = scalar_lea.vmem %s0, %s199
        %p201 = pneg %p40
        %p202 = pneg %p37
        %p203 = pneg %p61
        %p204 = pneg %p58
        %p205 = pneg %p82
        %p206 = pneg %p79
        %p207 = pneg %p103
        %p208 = pneg %p100
        %p209 = pneg %p124
        %p210 = pneg %p121
        %p211 = pneg %p150
        %p212 = pneg %p147
        %s213 = sand.u32 %s137, 1
        %s214 = scalar_lea.sflag [#allocation3], %s213
        %s215 = sand.u32 %s137, 1
        %s216 = smul.addr %s215, 8
        %s217 = scalar_lea.vmem [#allocation2], %s216
        %p218 = scmp.lt.s32.totalorder %s19, 1
        %s219 = scalar_select %p218, %s19, 1
        %s220 = smul.addr %s219, 2
        %s221 = smul.addr %s220, 4
        %s222 = scalar_lea.vmem %s0, %s221
        %v223 = vld [vmem:[%s222] sm:$0xff]
        %v224 = vld [vmem:[%s1] sm:$0xff]
        %v225 = vld [vmem:[%s1 + $0x8] sm:$0xf]
        %v226 = vld [vmem:[%s2] sm:$0xff]
        %v227 = vld [vmem:[%s2 + $0x8] sm:$0xf]
        %229 = vset.pattern.permute.xlu0 0
        %230 = vperm.xlu0 %229, %v226
        %v231 = vpop.permute.xlu0 %230
        %234 = vset.pattern.permute.xlu0 0
        %235 = vperm.xlu0 %234, %v227
        %v236 = vpop.permute.xlu0 %235
        %v239 = vcombine.high %v223, %v223
        %vm240 = vcmask 31744
        %v242 = vsel %vm240, %v224, 0
        %v245 = vsel %vm240, %v225, 0
        %vm247 = vcmask 1043456
        %v248 = vsel %vm247, %v223, 0
        %v250 = vsel %vm247, %v239, 0
        %252 = vmatprep.subr.mxu0 %v250
        %253 = vmatpush1.msra.mxu0 %v248
        %254 = vmatprep.subr.mxu0 0.0
        %255 = vmatpush1.msra.mxu0 0.0
        %256 = vmatprep.subr.mxu0 0.0
        %257 = vmatpush1.msra.mxu0 0.0
        %258 = vmatprep.subr.mxu0 0.0
        %259 = vmatpush1.msra.mxu0 0.0
        %260 = vmatprep.subr.mxu0 0.0
        %261 = vmatpush1.msra.mxu0 0.0
        %262 = vmatprep.subr.mxu0 0.0
        %263 = vmatpush1.msra.mxu0 0.0
        %264 = vmatprep.subr.mxu0 0.0
        %265 = vmatpush1.msra.mxu0 0.0
        %266 = vmatprep.subr.mxu0 0.0
        %267 = vmatpush1.msra.mxu0 0.0
        %268 = vmatprep.subr.mxu0 0.0
        %269 = vmatpush1.msra.mxu0 0.0
        %270 = vmatprep.subr.mxu0 0.0
        %271 = vmatpush1.msra.mxu0 0.0
        %272 = vmatprep.subr.mxu0 0.0
        %273 = vmatpush1.msra.mxu0 0.0
        %274 = vmatprep.subr.mxu0 0.0
        %275 = vmatpush1.msra.mxu0 0.0
        %276 = vmatprep.subr.mxu0 0.0
        %277 = vmatpush1.msra.mxu0 0.0
        %278 = vmatprep.subr.mxu0 0.0
        %279 = vmatpush1.msra.mxu0 0.0
        %280 = vmatprep.subr.mxu0 0.0
        %281 = vmatpush1.msra.mxu0 0.0
        %282 = vmatprep.subr.mxu0 0.0
        %283 = vmatpush1.msra.mxu0 0.0
        %284 = vmatprep.subr.mxu0 0.0
        %285 = vmatpush1.msra.mxu0 0.0
        %286 = vmatprep.subr.mxu0 0.0
        %287 = vmatpush1.msra.mxu0 0.0
        %288 = vmatprep.subr.mxu0 0.0
        %289 = vmatpush1.msra.mxu0 0.0
        %290 = vmatprep.subr.mxu0 0.0
        %291 = vmatpush1.msra.mxu0 0.0
        %292 = vmatprep.subr.mxu0 0.0
        %293 = vmatpush1.msra.mxu0 0.0
        %294 = vmatprep.subr.mxu0 0.0
        %295 = vmatpush1.msra.mxu0 0.0
        %296 = vmatprep.subr.mxu0 0.0
        %297 = vmatpush1.msra.mxu0 0.0
        %298 = vmatprep.subr.mxu0 0.0
        %299 = vmatpush1.msra.mxu0 0.0
        %300 = vmatprep.subr.mxu0 0.0
        %301 = vmatpush1.msra.mxu0 0.0
        %302 = vmatprep.subr.mxu0 0.0
        %303 = vmatpush1.msra.mxu0 0.0
        %304 = vmatprep.subr.mxu0 0.0
        %305 = vmatpush1.msra.mxu0 0.0
        %306 = vmatprep.subr.mxu0 0.0
        %307 = vmatpush1.msra.mxu0 0.0
        %308 = vmatprep.subr.mxu0 0.0
        %309 = vmatpush1.msra.mxu0 0.0
        %310 = vmatprep.subr.mxu0 0.0
        %311 = vmatpush1.msra.mxu0 0.0
        %312 = vmatprep.subr.mxu0 0.0
        %313 = vmatpush1.msra.mxu0 0.0
        %314 = vmatprep.subr.mxu0 0.0
        %315 = vmatpush1.msra.mxu0 0.0
        %316 = vmatprep.mubr.f32.mxu0 0.0
        %317 = vmatmul.mubr.f32.gmra.mrb[0].mxu0 %v242
        %v318 = vpop.f32.mrb[0].mxu0
        %v319 = vadd.f32 %v231, %v318
        %v320 = vpop.f32.mrb[0].mxu0
        %v321 = vadd.f32 %v231, %v320
        %322 = vmatprep.mubr.f32.mxu0 0.0
        %323 = vmatmul.mubr.f32.gmra.mrb[0].mxu0 %v245
        %v324 = vpop.f32.mrb[0].mxu0
        %v325 = vadd.f32 %v236, %v324
        %v326 = vpop.f32.mrb[0].mxu0
        %v327 = vadd.f32 %v236, %v326
        %328 = vdwg.mxu0
        %329 = vxpose.xlu0.b32.start [1/16] %v319, 128
        %330 = vxpose.xlu0.b32.cont [2/16] 0.0, 128
        %331 = vxpose.xlu0.b32.cont [3/16] 0.0, 128
        %332 = vxpose.xlu0.b32.cont [4/16] 0.0, 128
        %333 = vxpose.xlu0.b32.cont [5/16] 0.0, 128
        %334 = vxpose.xlu0.b32.cont [6/16] 0.0, 128
        %335 = vxpose.xlu0.b32.cont [7/16] 0.0, 128
        %336 = vxpose.xlu0.b32.cont [8/16] 0.0, 128
        %337 = vxpose.xlu0.b32.cont [9/16] 0.0, 128
        %338 = vxpose.xlu0.b32.cont [10/16] 0.0, 128
        %339 = vxpose.xlu0.b32.cont [11/16] 0.0, 128
        %340 = vxpose.xlu0.b32.cont [12/16] 0.0, 128
        %341 = vxpose.xlu0.b32.cont [13/16] 0.0, 128
        %342 = vxpose.xlu0.b32.cont [14/16] 0.0, 128
        %343 = vxpose.xlu0.b32.cont [15/16] 0.0, 128
        %344 = vxpose.xlu0.b32.end [16/16] 0.0, 128
        %v345 = vpop.trf.xlu0
        %v346 = vpop.trf.xlu0
        %v347 = vpop.trf.xlu0
        %v348 = vpop.trf.xlu0
        %v349 = vpop.trf.xlu0
        %v350 = vpop.trf.xlu0
        %v351 = vpop.trf.xlu0
        %v352 = vpop.trf.xlu0
        %v353 = vpop.trf.xlu0
        %v354 = vpop.trf.xlu0
        %v355 = vpop.trf.xlu0
        %v356 = vpop.trf.xlu0
        %v357 = vpop.trf.xlu0
        %v358 = vpop.trf.xlu0
        %v359 = vpop.trf.xlu0
        %v360 = vpop.trf.xlu0
        %361 = vxpose.xlu0.b32.start [1/16] %v321, 128
        %362 = vxpose.xlu0.b32.cont [2/16] 0.0, 128
        %363 = vxpose.xlu0.b32.cont [3/16] 0.0, 128
        %364 = vxpose.xlu0.b32.cont [4/16] 0.0, 128
        %365 = vxpose.xlu0.b32.cont [5/16] 0.0, 128
        %366 = vxpose.xlu0.b32.cont [6/16] 0.0, 128
        %367 = vxpose.xlu0.b32.cont [7/16] 0.0, 128
        %368 = vxpose.xlu0.b32.cont [8/16] 0.0, 128
        %369 = vxpose.xlu0.b32.cont [9/16] 0.0, 128
        %370 = vxpose.xlu0.b32.cont [10/16] 0.0, 128
        %371 = vxpose.xlu0.b32.cont [11/16] 0.0, 128
        %372 = vxpose.xlu0.b32.cont [12/16] 0.0, 128
        %373 = vxpose.xlu0.b32.cont [13/16] 0.0, 128
        %374 = vxpose.xlu0.b32.cont [14/16] 0.0, 128
        %375 = vxpose.xlu0.b32.cont [15/16] 0.0, 128
        %376 = vxpose.xlu0.b32.end [16/16] 0.0, 128
        %v377 = vpop.trf.xlu0
        %v378 = vpop.trf.xlu0
        %v379 = vpop.trf.xlu0
        %v380 = vpop.trf.xlu0
        %v381 = vpop.trf.xlu0
        %v382 = vpop.trf.xlu0
        %v383 = vpop.trf.xlu0
        %v384 = vpop.trf.xlu0
        %v385 = vpop.trf.xlu0
        %v386 = vpop.trf.xlu0
        %v387 = vpop.trf.xlu0
        %v388 = vpop.trf.xlu0
        %v389 = vpop.trf.xlu0
        %v390 = vpop.trf.xlu0
        %v391 = vpop.trf.xlu0
        %v392 = vpop.trf.xlu0
        %v395 = vrot.slane %v319, 4
        %v396 = vrot.slane %v321, 4
        %v398 = vsel %vm240, %v345, 0
        %v401 = vsel %vm240, %v346, 0
        %v404 = vsel %vm240, %v347, 0
        %v407 = vsel %vm240, %v348, 0
        %v410 = vsel %vm240, %v349, 0
        %v413 = vsel %vm240, %v350, 0
        %v416 = vsel %vm240, %v351, 0
        %v419 = vsel %vm240, %v352, 0
        %v422 = vsel %vm240, %v353, 0
        %v425 = vsel %vm240, %v354, 0
        %v428 = vsel %vm240, %v355, 0
        %v431 = vsel %vm240, %v356, 0
        %v434 = vsel %vm240, %v357, 0
        %v437 = vsel %vm240, %v358, 0
        %v440 = vsel %vm240, %v359, 0
        %v443 = vsel %vm240, %v360, 0
        %v446 = vsel %vm240, %v377, 0
        %v449 = vsel %vm240, %v378, 0
        %v452 = vsel %vm240, %v379, 0
        %v455 = vsel %vm240, %v380, 0
        %v458 = vsel %vm240, %v381, 0
        %v461 = vsel %vm240, %v382, 0
        %v464 = vsel %vm240, %v383, 0
        %v467 = vsel %vm240, %v384, 0
        %v470 = vsel %vm240, %v385, 0
        %v473 = vsel %vm240, %v386, 0
        %v476 = vsel %vm240, %v387, 0
        %v479 = vsel %vm240, %v388, 0
        %v482 = vsel %vm240, %v389, 0
        %v485 = vsel %vm240, %v390, 0
        %v488 = vsel %vm240, %v391, 0
        %v491 = vsel %vm240, %v392, 0
        %v493 = vsel %vm247, %v395, 0
        %v495 = vsel %vm247, %v396, 0
        %497 = vmatprep.subr.mxu0 %v495
        %498 = vmatpush1.msra.mxu0 %v493
        %499 = vmatprep.subr.mxu0 0.0
        %500 = vmatpush1.msra.mxu0 0.0
        %501 = vmatprep.subr.mxu0 0.0
        %502 = vmatpush1.msra.mxu0 0.0
        %503 = vmatprep.subr.mxu0 0.0
        %504 = vmatpush1.msra.mxu0 0.0
        %505 = vmatprep.subr.mxu0 0.0
        %506 = vmatpush1.msra.mxu0 0.0
        %507 = vmatprep.subr.mxu0 0.0
        %508 = vmatpush1.msra.mxu0 0.0
        %509 = vmatprep.subr.mxu0 0.0
        %510 = vmatpush1.msra.mxu0 0.0
        %511 = vmatprep.subr.mxu0 0.0
        %512 = vmatpush1.msra.mxu0 0.0
        %513 = vmatprep.subr.mxu0 0.0
        %514 = vmatpush1.msra.mxu0 0.0
        %515 = vmatprep.subr.mxu0 0.0
        %516 = vmatpush1.msra.mxu0 0.0
        %517 = vmatprep.subr.mxu0 0.0
        %518 = vmatpush1.msra.mxu0 0.0
        %519 = vmatprep.subr.mxu0 0.0
        %520 = vmatpush1.msra.mxu0 0.0
        %521 = vmatprep.subr.mxu0 0.0
        %522 = vmatpush1.msra.mxu0 0.0
        %523 = vmatprep.subr.mxu0 0.0
        %524 = vmatpush1.msra.mxu0 0.0
        %525 = vmatprep.subr.mxu0 0.0
        %526 = vmatpush1.msra.mxu0 0.0
        %527 = vmatprep.subr.mxu0 0.0
        %528 = vmatpush1.msra.mxu0 0.0
        %529 = vmatprep.subr.mxu0 0.0
        %530 = vmatpush1.msra.mxu0 0.0
        %531 = vmatprep.subr.mxu0 0.0
        %532 = vmatpush1.msra.mxu0 0.0
        %533 = vmatprep.subr.mxu0 0.0
        %534 = vmatpush1.msra.mxu0 0.0
        %535 = vmatprep.subr.mxu0 0.0
        %536 = vmatpush1.msra.mxu0 0.0
        %537 = vmatprep.subr.mxu0 0.0
        %538 = vmatpush1.msra.mxu0 0.0
        %539 = vmatprep.subr.mxu0 0.0
        %540 = vmatpush1.msra.mxu0 0.0
        %541 = vmatprep.subr.mxu0 0.0
        %542 = vmatpush1.msra.mxu0 0.0
        %543 = vmatprep.subr.mxu0 0.0
        %544 = vmatpush1.msra.mxu0 0.0
        %545 = vmatprep.subr.mxu0 0.0
        %546 = vmatpush1.msra.mxu0 0.0
        %547 = vmatprep.subr.mxu0 0.0
        %548 = vmatpush1.msra.mxu0 0.0
        %549 = vmatprep.subr.mxu0 0.0
        %550 = vmatpush1.msra.mxu0 0.0
        %551 = vmatprep.subr.mxu0 0.0
        %552 = vmatpush1.msra.mxu0 0.0
        %553 = vmatprep.subr.mxu0 0.0
        %554 = vmatpush1.msra.mxu0 0.0
        %555 = vmatprep.subr.mxu0 0.0
        %556 = vmatpush1.msra.mxu0 0.0
        %557 = vmatprep.subr.mxu0 0.0
        %558 = vmatpush1.msra.mxu0 0.0
        %559 = vmatprep.subr.mxu0 0.0
        %560 = vmatpush1.msra.mxu0 0.0
        %561 = vmatprep.mubr.f32.mxu0 0.0
        %562 = vmatmul.mubr.f32.gmra.mrb[0].mxu0 %v398
        %v563 = vpop.f32.mrb[0].mxu0
        %v564 = vadd.f32 0.0, %v563
        %v565 = vpop.f32.mrb[0].mxu0
        %v566 = vadd.f32 0.0, %v565
        %567 = vmatprep.mubr.f32.mxu0 0.0
        %568 = vmatmul.mubr.f32.gmra.mrb[0].mxu0 %v401
        %v569 = vpop.f32.mrb[0].mxu0
        %v570 = vadd.f32 0.0, %v569
        %v571 = vpop.f32.mrb[0].mxu0
        %v572 = vadd.f32 0.0, %v571
        %573 = vmatprep.mubr.f32.mxu0 0.0
        %574 = vmatmul.mubr.f32.gmra.mrb[0].mxu0 %v404
        %v575 = vpop.f32.mrb[0].mxu0
        %v576 = vadd.f32 0.0, %v575
        %v577 = vpop.f32.mrb[0].mxu0
        %v578 = vadd.f32 0.0, %v577
        %579 = vmatprep.mubr.f32.mxu0 0.0
        %580 = vmatmul.mubr.f32.gmra.mrb[0].mxu0 %v407
        %v581 = vpop.f32.mrb[0].mxu0
        %v582 = vadd.f32 0.0, %v581
        %v583 = vpop.f32.mrb[0].mxu0
        %v584 = vadd.f32 0.0, %v583
        %585 = vmatprep.mubr.f32.mxu0 0.0
        %586 = vmatmul.mubr.f32.gmra.mrb[0].mxu0 %v410
        %v587 = vpop.f32.mrb[0].mxu0
        %v588 = vadd.f32 0.0, %v587
        %v589 = vpop.f32.mrb[0].mxu0
        %v590 = vadd.f32 0.0, %v589
        %591 = vmatprep.mubr.f32.mxu0 0.0
        %592 = vmatmul.mubr.f32.gmra.mrb[0].mxu0 %v413
        %v593 = vpop.f32.mrb[0].mxu0
        %v594 = vadd.f32 0.0, %v593
        %v595 = vpop.f32.mrb[0].mxu0
        %v596 = vadd.f32 0.0, %v595
        %597 = vmatprep.mubr.f32.mxu0 0.0
        %598 = vmatmul.mubr.f32.gmra.mrb[0].mxu0 %v416
        %v599 = vpop.f32.mrb[0].mxu0
        %v600 = vadd.f32 0.0, %v599
        %v601 = vpop.f32.mrb[0].mxu0
        %v602 = vadd.f32 0.0, %v601
        %603 = vmatprep.mubr.f32.mxu0 0.0
        %604 = vmatmul.mubr.f32.gmra.mrb[0].mxu0 %v419
        %v605 = vpop.f32.mrb[0].mxu0
        %v606 = vadd.f32 0.0, %v605
        %v607 = vpop.f32.mrb[0].mxu0
        %v608 = vadd.f32 0.0, %v607
        %609 = vmatprep.mubr.f32.mxu0 0.0
        %610 = vmatmul.mubr.f32.gmra.mrb[0].mxu0 %v422
        %v611 = vpop.f32.mrb[0].mxu0
        %v612 = vadd.f32 0.0, %v611
        %v613 = vpop.f32.mrb[0].mxu0
        %v614 = vadd.f32 0.0, %v613
        %615 = vmatprep.mubr.f32.mxu0 0.0
        %616 = vmatmul.mubr.f32.gmra.mrb[0].mxu0 %v425
        %v617 = vpop.f32.mrb[0].mxu0
        %v618 = vadd.f32 0.0, %v617
        %v619 = vpop.f32.mrb[0].mxu0
        %v620 = vadd.f32 0.0, %v619
        %621 = vmatprep.mubr.f32.mxu0 0.0
        %622 = vmatmul.mubr.f32.gmra.mrb[0].mxu0 %v428
        %v623 = vpop.f32.mrb[0].mxu0
        %v624 = vadd.f32 0.0, %v623
        %v625 = vpop.f32.mrb[0].mxu0
        %v626 = vadd.f32 0.0, %v625
        %627 = vmatprep.mubr.f32.mxu0 0.0
        %628 = vmatmul.mubr.f32.gmra.mrb[0].mxu0 %v431
        %v629 = vpop.f32.mrb[0].mxu0
        %v630 = vadd.f32 0.0, %v629
        %v631 = vpop.f32.mrb[0].mxu0
        %v632 = vadd.f32 0.0, %v631
        %633 = vmatprep.mubr.f32.mxu0 0.0
        %634 = vmatmul.mubr.f32.gmra.mrb[0].mxu0 %v434
        %v635 = vpop.f32.mrb[0].mxu0
        %v636 = vadd.f32 0.0, %v635
        %v637 = vpop.f32.mrb[0].mxu0
        %v638 = vadd.f32 0.0, %v637
        %639 = vmatprep.mubr.f32.mxu0 0.0
        %640 = vmatmul.mubr.f32.gmra.mrb[0].mxu0 %v437
        %v641 = vpop.f32.mrb[0].mxu0
        %v642 = vadd.f32 0.0, %v641
        %v643 = vpop.f32.mrb[0].mxu0
        %v644 = vadd.f32 0.0, %v643
        %645 = vmatprep.mubr.f32.mxu0 0.0
        %646 = vmatmul.mubr.f32.gmra.mrb[0].mxu0 %v440
        %v647 = vpop.f32.mrb[0].mxu0
        %v648 = vadd.f32 0.0, %v647
        %v649 = vpop.f32.mrb[0].mxu0
        %v650 = vadd.f32 0.0, %v649
        %651 = vmatprep.mubr.f32.mxu0 0.0
        %652 = vmatmul.mubr.f32.gmra.mrb[0].mxu0 %v443
        %v653 = vpop.f32.mrb[0].mxu0
        %v654 = vadd.f32 0.0, %v653
        %v655 = vpop.f32.mrb[0].mxu0
        %v656 = vadd.f32 0.0, %v655
        %657 = vmatprep.mubr.f32.mxu0 0.0
        %658 = vmatmul.mubr.f32.gmra.mrb[0].mxu0 %v446
        %v659 = vpop.f32.mrb[0].mxu0
        %v660 = vadd.f32 0.0, %v659
        %v661 = vpop.f32.mrb[0].mxu0
        %v662 = vadd.f32 0.0, %v661
        %663 = vmatprep.mubr.f32.mxu0 0.0
        %664 = vmatmul.mubr.f32.gmra.mrb[0].mxu0 %v449
        %v665 = vpop.f32.mrb[0].mxu0
        %v666 = vadd.f32 0.0, %v665
        %v667 = vpop.f32.mrb[0].mxu0
        %v668 = vadd.f32 0.0, %v667
        %669 = vmatprep.mubr.f32.mxu0 0.0
        %670 = vmatmul.mubr.f32.gmra.mrb[0].mxu0 %v452
        %v671 = vpop.f32.mrb[0].mxu0
        %v672 = vadd.f32 0.0, %v671
        %v673 = vpop.f32.mrb[0].mxu0
        %v674 = vadd.f32 0.0, %v673
        %675 = vmatprep.mubr.f32.mxu0 0.0
        %676 = vmatmul.mubr.f32.gmra.mrb[0].mxu0 %v455
        %v677 = vpop.f32.mrb[0].mxu0
        %v678 = vadd.f32 0.0, %v677
        %v679 = vpop.f32.mrb[0].mxu0
        %v680 = vadd.f32 0.0, %v679
        %681 = vmatprep.mubr.f32.mxu0 0.0
        %682 = vmatmul.mubr.f32.gmra.mrb[0].mxu0 %v458
        %v683 = vpop.f32.mrb[0].mxu0
        %v684 = vadd.f32 0.0, %v683
        %v685 = vpop.f32.mrb[0].mxu0
        %v686 = vadd.f32 0.0, %v685
        %687 = vmatprep.mubr.f32.mxu0 0.0
        %688 = vmatmul.mubr.f32.gmra.mrb[0].mxu0 %v461
        %v689 = vpop.f32.mrb[0].mxu0
        %v690 = vadd.f32 0.0, %v689
        %v691 = vpop.f32.mrb[0].mxu0
        %v692 = vadd.f32 0.0, %v691
        %693 = vmatprep.mubr.f32.mxu0 0.0
        %694 = vmatmul.mubr.f32.gmra.mrb[0].mxu0 %v464
        %v695 = vpop.f32.mrb[0].mxu0
        %v696 = vadd.f32 0.0, %v695
        %v697 = vpop.f32.mrb[0].mxu0
        %v698 = vadd.f32 0.0, %v697
        %699 = vmatprep.mubr.f32.mxu0 0.0
        %700 = vmatmul.mubr.f32.gmra.mrb[0].mxu0 %v467
        %v701 = vpop.f32.mrb[0].mxu0
        %v702 = vadd.f32 0.0, %v701
        %v703 = vpop.f32.mrb[0].mxu0
        %v704 = vadd.f32 0.0, %v703
        %705 = vmatprep.mubr.f32.mxu0 0.0
        %706 = vmatmul.mubr.f32.gmra.mrb[0].mxu0 %v470
        %v707 = vpop.f32.mrb[0].mxu0
        %v708 = vadd.f32 0.0, %v707
        %v709 = vpop.f32.mrb[0].mxu0
        %v710 = vadd.f32 0.0, %v709
        %711 = vmatprep.mubr.f32.mxu0 0.0
        %712 = vmatmul.mubr.f32.gmra.mrb[0].mxu0 %v473
        %v713 = vpop.f32.mrb[0].mxu0
        %v714 = vadd.f32 0.0, %v713
        %v715 = vpop.f32.mrb[0].mxu0
        %v716 = vadd.f32 0.0, %v715
        %717 = vmatprep.mubr.f32.mxu0 0.0
        %718 = vmatmul.mubr.f32.gmra.mrb[0].mxu0 %v476
        %v719 = vpop.f32.mrb[0].mxu0
        %v720 = vadd.f32 0.0, %v719
        %v721 = vpop.f32.mrb[0].mxu0
        %v722 = vadd.f32 0.0, %v721
        %723 = vmatprep.mubr.f32.mxu0 0.0
        %724 = vmatmul.mubr.f32.gmra.mrb[0].mxu0 %v479
        %v725 = vpop.f32.mrb[0].mxu0
        %v726 = vadd.f32 0.0, %v725
        %v727 = vpop.f32.mrb[0].mxu0
        %v728 = vadd.f32 0.0, %v727
        %729 = vmatprep.mubr.f32.mxu0 0.0
        %730 = vmatmul.mubr.f32.gmra.mrb[0].mxu0 %v482
        %v731 = vpop.f32.mrb[0].mxu0
        %v732 = vadd.f32 0.0, %v731
        %v733 = vpop.f32.mrb[0].mxu0
        %v734 = vadd.f32 0.0, %v733
        %735 = vmatprep.mubr.f32.mxu0 0.0
        %736 = vmatmul.mubr.f32.gmra.mrb[0].mxu0 %v485
        %v737 = vpop.f32.mrb[0].mxu0
        %v738 = vadd.f32 0.0, %v737
        %v739 = vpop.f32.mrb[0].mxu0
        %v740 = vadd.f32 0.0, %v739
        %741 = vmatprep.mubr.f32.mxu0 0.0
        %742 = vmatmul.mubr.f32.gmra.mrb[0].mxu0 %v488
        %v743 = vpop.f32.mrb[0].mxu0
        %v744 = vadd.f32 0.0, %v743
        %v745 = vpop.f32.mrb[0].mxu0
        %v746 = vadd.f32 0.0, %v745
        %747 = vmatprep.mubr.f32.mxu0 0.0
        %748 = vmatmul.mubr.f32.gmra.mrb[0].mxu0 %v491
        %v749 = vpop.f32.mrb[0].mxu0
        %v750 = vadd.f32 0.0, %v749
        %v751 = vpop.f32.mrb[0].mxu0
        %v752 = vadd.f32 0.0, %v751
        %753 = vdwg.mxu0
        %v754 = vmax.f32 %v564, %v576
        %v755 = vmax.f32 %v570, %v582
        %v756 = vmax.f32 %v754, %v588
        %v757 = vmax.f32 %v755, %v594
        %v758 = vmax.f32 %v756, %v600
        %v759 = vmax.f32 %v757, %v606
        %v760 = vmax.f32 %v758, %v612
        %v761 = vmax.f32 %v759, %v618
        %v762 = vmax.f32 %v760, %v624
        %v763 = vmax.f32 %v761, %v630
        %v764 = vmax.f32 %v762, %v636
        %v765 = vmax.f32 %v763, %v642
        %v766 = vmax.f32 %v764, %v648
        %v767 = vmax.f32 %v765, %v654
        %v768 = vmax.f32 %v766, %v660
        %v769 = vmax.f32 %v767, %v666
        %v770 = vmax.f32 %v768, %v672
        %v771 = vmax.f32 %v769, %v678
        %v772 = vmax.f32 %v770, %v684
        %v773 = vmax.f32 %v771, %v690
        %v774 = vmax.f32 %v772, %v696
        %v775 = vmax.f32 %v773, %v702
        %v776 = vmax.f32 %v774, %v708
        %v777 = vmax.f32 %v775, %v714
        %v778 = vmax.f32 %v776, %v720
        %v779 = vmax.f32 %v777, %v726
        %v780 = vmax.f32 %v778, %v732
        %v781 = vmax.f32 %v779, %v738
        %v782 = vmax.f32 %v780, %v744
        %v783 = vmax.f32 %v781, %v750
        %v784 = vmax.f32 %v782, %v783
        %v785 = vrot.slane %v784, 4
        %v786 = vmax.f32 %v784, %v785
        %v787 = vrot.slane %v786, 2
        %v788 = vmax.f32 %v786, %v787
        %v789 = vrot.slane %v788, 1
        %v790 = vmax.f32 %v788, %v789
        %v791 = vmax.f32 %v566, %v578
        %v792 = vmax.f32 %v572, %v584
        %v793 = vmax.f32 %v791, %v590
        %v794 = vmax.f32 %v792, %v596
        %v795 = vmax.f32 %v793, %v602
        %v796 = vmax.f32 %v794, %v608
        %v797 = vmax.f32 %v795, %v614
        %v798 = vmax.f32 %v796, %v620
        %v799 = vmax.f32 %v797, %v626
        %v800 = vmax.f32 %v798, %v632
        %v801 = vmax.f32 %v799, %v638
        %v802 = vmax.f32 %v800, %v644
        %v803 = vmax.f32 %v801, %v650
        %v804 = vmax.f32 %v802, %v656
        %v805 = vmax.f32 %v803, %v662
        %v806 = vmax.f32 %v804, %v668
        %v807 = vmax.f32 %v805, %v674
        %v808 = vmax.f32 %v806, %v680
        %v809 = vmax.f32 %v807, %v686
        %v810 = vmax.f32 %v808, %v692
        %v811 = vmax.f32 %v809, %v698
        %v812 = vmax.f32 %v810, %v704
        %v813 = vmax.f32 %v811, %v710
        %v814 = vmax.f32 %v812, %v716
        %v815 = vmax.f32 %v813, %v722
        %v816 = vmax.f32 %v814, %v728
        %v817 = vmax.f32 %v815, %v734
        %v818 = vmax.f32 %v816, %v740
        %v819 = vmax.f32 %v817, %v746
        %v820 = vmax.f32 %v818, %v752
        %v821 = vmax.f32 %v819, %v820
        %v822 = vrot.slane %v821, 4
        %v823 = vmax.f32 %v821, %v822
        %v824 = vrot.slane %v823, 2
        %v825 = vmax.f32 %v823, %v824
        %v826 = vrot.slane %v825, 1
        %v827 = vmax.f32 %v825, %v826
        %v828 = vsub.f32 %v564, %v790
        %v829 = vsub.f32 %v566, %v827
        %v830 = vsub.f32 %v570, %v790
        %v831 = vsub.f32 %v572, %v827
        %v832 = vsub.f32 %v576, %v790
        %v833 = vsub.f32 %v578, %v827
        %v834 = vsub.f32 %v582, %v790
        %v835 = vsub.f32 %v584, %v827
        %v836 = vsub.f32 %v588, %v790
        %v837 = vsub.f32 %v590, %v827
        %v838 = vsub.f32 %v594, %v790
        %v839 = vsub.f32 %v596, %v827
        %v840 = vsub.f32 %v600, %v790
        %v841 = vsub.f32 %v602, %v827
        %v842 = vsub.f32 %v606, %v790
        %v843 = vsub.f32 %v608, %v827
        %v844 = vsub.f32 %v612, %v790
        %v845 = vsub.f32 %v614, %v827
        %v846 = vsub.f32 %v618, %v790
        %v847 = vsub.f32 %v620, %v827
        %v848 = vsub.f32 %v624, %v790
        %v849 = vsub.f32 %v626, %v827
        %v850 = vsub.f32 %v630, %v790
        %v851 = vsub.f32 %v632, %v827
        %v852 = vsub.f32 %v636, %v790
        %v853 = vsub.f32 %v638, %v827
        %v854 = vsub.f32 %v642, %v790
        %v855 = vsub.f32 %v644, %v827
        %v856 = vsub.f32 %v648, %v790
        %v857 = vsub.f32 %v650, %v827
        %v858 = vsub.f32 %v654, %v790
        %v859 = vsub.f32 %v656, %v827
        %v860 = vsub.f32 %v660, %v790
        %v861 = vsub.f32 %v662, %v827
        %v862 = vsub.f32 %v666, %v790
        %v863 = vsub.f32 %v668, %v827
        %v864 = vsub.f32 %v672, %v790
        %v865 = vsub.f32 %v674, %v827
        %v866 = vsub.f32 %v678, %v790
        %v867 = vsub.f32 %v680, %v827
        %v868 = vsub.f32 %v684, %v790
        %v869 = vsub.f32 %v686, %v827
        %v870 = vsub.f32 %v690, %v790
        %v871 = vsub.f32 %v692, %v827
        %v872 = vsub.f32 %v696, %v790
        %v873 = vsub.f32 %v698, %v827
        %v874 = vsub.f32 %v702, %v790
        %v875 = vsub.f32 %v704, %v827
        %v876 = vsub.f32 %v708, %v790
        %v877 = vsub.f32 %v710, %v827
        %v878 = vsub.f32 %v714, %v790
        %v879 = vsub.f32 %v716, %v827
        %v880 = vsub.f32 %v720, %v790
        %v881 = vsub.f32 %v722, %v827
        %v882 = vsub.f32 %v726, %v790
        %v883 = vsub.f32 %v728, %v827
        %v884 = vsub.f32 %v732, %v790
        %v885 = vsub.f32 %v734, %v827
        %v886 = vsub.f32 %v738, %v790
        %v887 = vsub.f32 %v740, %v827
        %v888 = vsub.f32 %v744, %v790
        %v889 = vsub.f32 %v746, %v827
        %v890 = vsub.f32 %v750, %v790
        %v891 = vsub.f32 %v752, %v827
        %v892 = vmul.f32 %v828, 1.442695
        %v893 = vpow.pop %v892
        %v894 = vmul.f32 %v829, 1.442695
        %v895 = vpow.pop %v894
        %v896 = vmul.f32 %v830, 1.442695
        %v897 = vpow.pop %v896
        %v898 = vmul.f32 %v831, 1.442695
        %v899 = vpow.pop %v898
        %v900 = vmul.f32 %v832, 1.442695
        %v901 = vpow.pop %v900
        %v902 = vmul.f32 %v833, 1.442695
        %v903 = vpow.pop %v902
        %v904 = vmul.f32 %v834, 1.442695
        %v905 = vpow.pop %v904
        %v906 = vmul.f32 %v835, 1.442695
        %v907 = vpow.pop %v906
        %v908 = vmul.f32 %v836, 1.442695
        %v909 = vpow.pop %v908
        %v910 = vmul.f32 %v837, 1.442695
        %v911 = vpow.pop %v910
        %v912 = vmul.f32 %v838, 1.442695
        %v913 = vpow.pop %v912
        %v914 = vmul.f32 %v839, 1.442695
        %v915 = vpow.pop %v914
        %v916 = vmul.f32 %v840, 1.442695
        %v917 = vpow.pop %v916
        %v918 = vmul.f32 %v841, 1.442695
        %v919 = vpow.pop %v918
        %v920 = vmul.f32 %v842, 1.442695
        %v921 = vpow.pop %v920
        %v922 = vmul.f32 %v843, 1.442695
        %v923 = vpow.pop %v922
        %v924 = vmul.f32 %v844, 1.442695
        %v925 = vpow.pop %v924
        %v926 = vmul.f32 %v845, 1.442695
        %v927 = vpow.pop %v926
        %v928 = vmul.f32 %v846, 1.442695
        %v929 = vpow.pop %v928
        %v930 = vmul.f32 %v847, 1.442695
        %v931 = vpow.pop %v930
        %v932 = vmul.f32 %v848, 1.442695
        %v933 = vpow.pop %v932
        %v934 = vmul.f32 %v849, 1.442695
        %v935 = vpow.pop %v934
        %v936 = vmul.f32 %v850, 1.442695
        %v937 = vpow.pop %v936
        %v938 = vmul.f32 %v851, 1.442695
        %v939 = vpow.pop %v938
        %v940 = vmul.f32 %v852, 1.442695
        %v941 = vpow.pop %v940
        %v942 = vmul.f32 %v853, 1.442695
        %v943 = vpow.pop %v942
        %v944 = vmul.f32 %v854, 1.442695
        %v945 = vpow.pop %v944
        %v946 = vmul.f32 %v855, 1.442695
        %v947 = vpow.pop %v946
        %v948 = vmul.f32 %v856, 1.442695
        %v949 = vpow.pop %v948
        %v950 = vmul.f32 %v857, 1.442695
        %v951 = vpow.pop %v950
        %v952 = vmul.f32 %v858, 1.442695
        %v953 = vpow.pop %v952
        %v954 = vmul.f32 %v859, 1.442695
        %v955 = vpow.pop %v954
        %v956 = vmul.f32 %v860, 1.442695
        %v957 = vpow.pop %v956
        %v958 = vmul.f32 %v861, 1.442695
        %v959 = vpow.pop %v958
        %v960 = vmul.f32 %v862, 1.442695
        %v961 = vpow.pop %v960
        %v962 = vmul.f32 %v863, 1.442695
        %v963 = vpow.pop %v962
        %v964 = vmul.f32 %v864, 1.442695
        %v965 = vpow.pop %v964
        %v966 = vmul.f32 %v865, 1.442695
        %v967 = vpow.pop %v966
        %v968 = vmul.f32 %v866, 1.442695
        %v969 = vpow.pop %v968
        %v970 = vmul.f32 %v867, 1.442695
        %v971 = vpow.pop %v970
        %v972 = vmul.f32 %v868, 1.442695
        %v973 = vpow.pop %v972
        %v974 = vmul.f32 %v869, 1.442695
        %v975 = vpow.pop %v974
        %v976 = vmul.f32 %v870, 1.442695
        %v977 = vpow.pop %v976
        %v978 = vmul.f32 %v871, 1.442695
        %v979 = vpow.pop %v978
        %v980 = vmul.f32 %v872, 1.442695
        %v981 = vpow.pop %v980
        %v982 = vmul.f32 %v873, 1.442695
        %v983 = vpow.pop %v982
        %v984 = vmul.f32 %v874, 1.442695
        %v985 = vpow.pop %v984
        %v986 = vmul.f32 %v875, 1.442695
        %v987 = vpow.pop %v986
        %v988 = vmul.f32 %v876, 1.442695
        %v989 = vpow.pop %v988
        %v990 = vmul.f32 %v877, 1.442695
        %v991 = vpow.pop %v990
        %v992 = vmul.f32 %v878, 1.442695
        %v993 = vpow.pop %v992
        %v994 = vmul.f32 %v879, 1.442695
        %v995 = vpow.pop %v994
        %v996 = vmul.f32 %v880, 1.442695
        %v997 = vpow.pop %v996
        %v998 = vmul.f32 %v881, 1.442695
        %v999 = vpow.pop %v998
        %v1000 = vmul.f32 %v882, 1.442695
        %v1001 = vpow.pop %v1000
        %v1002 = vmul.f32 %v883, 1.442695
        %v1003 = vpow.pop %v1002
        %v1004 = vmul.f32 %v884, 1.442695
        %v1005 = vpow.pop %v1004
        %v1006 = vmul.f32 %v885, 1.442695
        %v1007 = vpow.pop %v1006
        %v1008 = vmul.f32 %v886, 1.442695
        %v1009 = vpow.pop %v1008
        %v1010 = vmul.f32 %v887, 1.442695
        %v1011 = vpow.pop %v1010
        %v1012 = vmul.f32 %v888, 1.442695
        %v1013 = vpow.pop %v1012
        %v1014 = vmul.f32 %v889, 1.442695
        %v1015 = vpow.pop %v1014
        %v1016 = vmul.f32 %v890, 1.442695
        %v1017 = vpow.pop %v1016
        %v1018 = vmul.f32 %v891, 1.442695
        %v1019 = vpow.pop %v1018
        %v1020 = vadd.f32 %v893, %v897
        %v1021 = vadd.f32 %v1020, %v901
        %v1022 = vadd.f32 %v1021, %v905
        %v1023 = vadd.f32 %v1022, %v909
        %v1024 = vadd.f32 %v1023, %v913
        %v1025 = vadd.f32 %v1024, %v917
        %v1026 = vadd.f32 %v1025, %v921
        %v1027 = vadd.f32 %v1026, %v925
        %v1028 = vadd.f32 %v1027, %v929
        %v1029 = vadd.f32 %v1028, %v933
        %v1030 = vadd.f32 %v1029, %v937
        %v1031 = vadd.f32 %v1030, %v941
        %v1032 = vadd.f32 %v1031, %v945
        %v1033 = vadd.f32 %v1032, %v949
        %v1034 = vadd.f32 %v1033, %v953
        %v1035 = vadd.f32 %v1034, %v957
        %v1036 = vadd.f32 %v1035, %v961
        %v1037 = vadd.f32 %v1036, %v965
        %v1038 = vadd.f32 %v1037, %v969
        %v1039 = vadd.f32 %v1038, %v973
        %v1040 = vadd.f32 %v1039, %v977
        %v1041 = vadd.f32 %v1040, %v981
        %v1042 = vadd.f32 %v1041, %v985
        %v1043 = vadd.f32 %v1042, %v989
        %v1044 = vadd.f32 %v1043, %v993
        %v1045 = vadd.f32 %v1044, %v997
        %v1046 = vadd.f32 %v1045, %v1001
        %v1047 = vadd.f32 %v1046, %v1005
        %v1048 = vadd.f32 %v1047, %v1009
        %v1049 = vadd.f32 %v1048, %v1013
        %v1050 = vadd.f32 %v1049, %v1017
        %v1051 = vrot.slane %v1050, 4
        %v1052 = vadd.f32 %v1050, %v1051
        %v1053 = vrot.slane %v1052, 2
        %v1054 = vadd.f32 %v1052, %v1053
        %v1055 = vrot.slane %v1054, 1
        %v1056 = vadd.f32 %v1054, %v1055
        %v1057 = vadd.f32 %v895, %v899
        %v1058 = vadd.f32 %v1057, %v903
        %v1059 = vadd.f32 %v1058, %v907
        %v1060 = vadd.f32 %v1059, %v911
        %v1061 = vadd.f32 %v1060, %v915
        %v1062 = vadd.f32 %v1061, %v919
        %v1063 = vadd.f32 %v1062, %v923
        %v1064 = vadd.f32 %v1063, %v927
        %v1065 = vadd.f32 %v1064, %v931
        %v1066 = vadd.f32 %v1065, %v935
        %v1067 = vadd.f32 %v1066, %v939
        %v1068 = vadd.f32 %v1067, %v943
        %v1069 = vadd.f32 %v1068, %v947
        %v1070 = vadd.f32 %v1069, %v951
        %v1071 = vadd.f32 %v1070, %v955
        %v1072 = vadd.f32 %v1071, %v959
        %v1073 = vadd.f32 %v1072, %v963
        %v1074 = vadd.f32 %v1073, %v967
        %v1075 = vadd.f32 %v1074, %v971
        %v1076 = vadd.f32 %v1075, %v975
        %v1077 = vadd.f32 %v1076, %v979
        %v1078 = vadd.f32 %v1077, %v983
        %v1079 = vadd.f32 %v1078, %v987
        %v1080 = vadd.f32 %v1079, %v991
        %v1081 = vadd.f32 %v1080, %v995
        %v1082 = vadd.f32 %v1081, %v999
        %v1083 = vadd.f32 %v1082, %v1003
        %v1084 = vadd.f32 %v1083, %v1007
        %v1085 = vadd.f32 %v1084, %v1011
        %v1086 = vadd.f32 %v1085, %v1015
        %v1087 = vadd.f32 %v1086, %v1019
        %v1088 = vrot.slane %v1087, 4
        %v1089 = vadd.f32 %v1087, %v1088
        %v1090 = vrot.slane %v1089, 2
        %v1091 = vadd.f32 %v1089, %v1090
        %v1092 = vrot.slane %v1091, 1
        %v1093 = vadd.f32 %v1091, %v1092
        %v1094 = vrcp.pop %v1056
        %v1095 = vrcp.pop %v1093
        %v1096 = vmul.f32 %v325, %v1094
        %v1097 = vmul.f32 %v327, %v1095
        %v1098 = vpack.c.bf16 %v1096, %v1096
        %v1099 = vpack.c.bf16 %v1097, %v1097
        %v1100 = vpack.c.bf16 %v897, %v893
        %v1101 = vpack.c.bf16 %v899, %v895
        %v1102 = vpack.c.bf16 %v905, %v901
        %v1103 = vpack.c.bf16 %v907, %v903
        %v1104 = vpack.c.bf16 %v913, %v909
        %v1105 = vpack.c.bf16 %v915, %v911
        %v1106 = vpack.c.bf16 %v921, %v917
        %v1107 = vpack.c.bf16 %v923, %v919
        %v1108 = vpack.c.bf16 %v929, %v925
        %v1109 = vpack.c.bf16 %v931, %v927
        %v1110 = vpack.c.bf16 %v937, %v933
        %v1111 = vpack.c.bf16 %v939, %v935
        %v1112 = vpack.c.bf16 %v945, %v941
        %v1113 = vpack.c.bf16 %v947, %v943
        %v1114 = vpack.c.bf16 %v953, %v949
        %v1115 = vpack.c.bf16 %v955, %v951
        %v1116 = vpack.c.bf16 %v961, %v957
        %v1117 = vpack.c.bf16 %v963, %v959
        %v1118 = vpack.c.bf16 %v969, %v965
        %v1119 = vpack.c.bf16 %v971, %v967
        %v1120 = vpack.c.bf16 %v977, %v973
        %v1121 = vpack.c.bf16 %v979, %v975
        %v1122 = vpack.c.bf16 %v985, %v981
        %v1123 = vpack.c.bf16 %v987, %v983
        %v1124 = vpack.c.bf16 %v993, %v989
        %v1125 = vpack.c.bf16 %v995, %v991
        %v1126 = vpack.c.bf16 %v1001, %v997
        %v1127 = vpack.c.bf16 %v1003, %v999
        %v1128 = vpack.c.bf16 %v1009, %v1005
        %v1129 = vpack.c.bf16 %v1011, %v1007
        %v1130 = vpack.c.bf16 %v1017, %v1013
        %v1131 = vpack.c.bf16 %v1019, %v1015
        %1132 = vmatprep.subr.bf16.mxu0 %v1101
        %1133 = vmatpush1.bf16.xpose.msra.mxu0 %v1100
        %1134 = vmatprep.subr.bf16.mxu0 %v1103
        %1135 = vmatpush1.bf16.xpose.msra.mxu0 %v1102
        %1136 = vmatprep.subr.bf16.mxu0 %v1105
        %1137 = vmatpush1.bf16.xpose.msra.mxu0 %v1104
        %1138 = vmatprep.subr.bf16.mxu0 %v1107
        %1139 = vmatpush1.bf16.xpose.msra.mxu0 %v1106
        %1140 = vmatprep.subr.bf16.mxu0 %v1109
        %1141 = vmatpush1.bf16.xpose.msra.mxu0 %v1108
        %1142 = vmatprep.subr.bf16.mxu0 %v1111
        %1143 = vmatpush1.bf16.xpose.msra.mxu0 %v1110
        %1144 = vmatprep.subr.bf16.mxu0 %v1113
        %1145 = vmatpush1.bf16.xpose.msra.mxu0 %v1112
        %1146 = vmatprep.subr.bf16.mxu0 %v1115
        %1147 = vmatpush1.bf16.xpose.msra.mxu0 %v1114
        %1148 = vmatprep.subr.bf16.mxu0 %v1117
        %1149 = vmatpush1.bf16.xpose.msra.mxu0 %v1116
        %1150 = vmatprep.subr.bf16.mxu0 %v1119
        %1151 = vmatpush1.bf16.xpose.msra.mxu0 %v1118
        %1152 = vmatprep.subr.bf16.mxu0 %v1121
        %1153 = vmatpush1.bf16.xpose.msra.mxu0 %v1120
        %1154 = vmatprep.subr.bf16.mxu0 %v1123
        %1155 = vmatpush1.bf16.xpose.msra.mxu0 %v1122
        %1156 = vmatprep.subr.bf16.mxu0 %v1125
        %1157 = vmatpush1.bf16.xpose.msra.mxu0 %v1124
        %1158 = vmatprep.subr.bf16.mxu0 %v1127
        %1159 = vmatpush1.bf16.xpose.msra.mxu0 %v1126
        %1160 = vmatprep.subr.bf16.mxu0 %v1129
        %1161 = vmatpush1.bf16.xpose.msra.mxu0 %v1128
        %1162 = vmatprep.subr.bf16.mxu0 %v1131
        %1163 = vmatpush1.bf16.xpose.msra.mxu0 %v1130
        %1164 = vmatprep.mubr.bf16.mxu0 %v1099
        %1165 = vmatmul.mubr.bf16.gmra.mrb[0].mxu0 %v1098
        %v1166 = vpop.f32.mrb[0].mxu0
        %v1167 = vadd.f32 0.0, %v1166
        %v1168 = vpop.f32.mrb[0].mxu0
        %v1169 = vadd.f32 0.0, %v1168
        %v1170 = vpop.f32.mrb[0].mxu0
        %v1171 = vpop.f32.mrb[0].mxu0
        %1172 = vdwg.mxu0
        %v1173 = vld [vmem:[%s3] sm:$0xf]
        %v1174 = vld [vmem:[%s4] sm:$0xf]
        %1176 = vset.pattern.permute.xlu0 0
        %1177 = vperm.xlu0 %1176, %v1174
        %v1178 = vpop.permute.xlu0 %1177
        %v1181 = vsel %vm240, %v1173, 0
        %v1184 = vsel %vm247, %v1167, 0
        %v1187 = vsel %vm247, %v1169, 0
        %1189 = vmatprep.subr.mxu0 %v1187
        %1190 = vmatpush1.msra.mxu0 %v1184
        %1191 = vmatprep.subr.mxu0 0.0
        %1192 = vmatpush1.msra.mxu0 0.0
        %1193 = vmatprep.subr.mxu0 0.0
        %1194 = vmatpush1.msra.mxu0 0.0
        %1195 = vmatprep.subr.mxu0 0.0
        %1196 = vmatpush1.msra.mxu0 0.0
        %1197 = vmatprep.subr.mxu0 0.0
        %1198 = vmatpush1.msra.mxu0 0.0
        %1199 = vmatprep.subr.mxu0 0.0
        %1200 = vmatpush1.msra.mxu0 0.0
        %1201 = vmatprep.subr.mxu0 0.0
        %1202 = vmatpush1.msra.mxu0 0.0
        %1203 = vmatprep.subr.mxu0 0.0
        %1204 = vmatpush1.msra.mxu0 0.0
        %1205 = vmatprep.subr.mxu0 0.0
        %1206 = vmatpush1.msra.mxu0 0.0
        %1207 = vmatprep.subr.mxu0 0.0
        %1208 = vmatpush1.msra.mxu0 0.0
        %1209 = vmatprep.subr.mxu0 0.0
        %1210 = vmatpush1.msra.mxu0 0.0
        %1211 = vmatprep.subr.mxu0 0.0
        %1212 = vmatpush1.msra.mxu0 0.0
        %1213 = vmatprep.subr.mxu0 0.0
        %1214 = vmatpush1.msra.mxu0 0.0
        %1215 = vmatprep.subr.mxu0 0.0
        %1216 = vmatpush1.msra.mxu0 0.0
        %1217 = vmatprep.subr.mxu0 0.0
        %1218 = vmatpush1.msra.mxu0 0.0
        %1219 = vmatprep.subr.mxu0 0.0
        %1220 = vmatpush1.msra.mxu0 0.0
        %1221 = vmatprep.subr.mxu0 0.0
        %1222 = vmatpush1.msra.mxu0 0.0
        %1223 = vmatprep.subr.mxu0 0.0
        %1224 = vmatpush1.msra.mxu0 0.0
        %1225 = vmatprep.subr.mxu0 0.0
        %1226 = vmatpush1.msra.mxu0 0.0
        %1227 = vmatprep.subr.mxu0 0.0
        %1228 = vmatpush1.msra.mxu0 0.0
        %1229 = vmatprep.subr.mxu0 0.0
        %1230 = vmatpush1.msra.mxu0 0.0
        %1231 = vmatprep.subr.mxu0 0.0
        %1232 = vmatpush1.msra.mxu0 0.0
        %1233 = vmatprep.subr.mxu0 0.0
        %1234 = vmatpush1.msra.mxu0 0.0
        %1235 = vmatprep.subr.mxu0 0.0
        %1236 = vmatpush1.msra.mxu0 0.0
        %1237 = vmatprep.subr.mxu0 0.0
        %1238 = vmatpush1.msra.mxu0 0.0
        %1239 = vmatprep.subr.mxu0 0.0
        %1240 = vmatpush1.msra.mxu0 0.0
        %1241 = vmatprep.subr.mxu0 0.0
        %1242 = vmatpush1.msra.mxu0 0.0
        %1243 = vmatprep.subr.mxu0 0.0
        %1244 = vmatpush1.msra.mxu0 0.0
        %1245 = vmatprep.subr.mxu0 0.0
        %1246 = vmatpush1.msra.mxu0 0.0
        %1247 = vmatprep.subr.mxu0 0.0
        %1248 = vmatpush1.msra.mxu0 0.0
        %1249 = vmatprep.subr.mxu0 0.0
        %1250 = vmatpush1.msra.mxu0 0.0
        %1251 = vmatprep.subr.mxu0 0.0
        %1252 = vmatpush1.msra.mxu0 0.0
        %1253 = vmatprep.mubr.f32.mxu0 0.0
        %1254 = vmatmul.mubr.f32.gmra.mrb[0].mxu0 %v1181
        %v1255 = vpop.f32.mrb[0].mxu0
        %v1256 = vadd.f32 %v1178, %v1255
        %v1257 = vpop.f32.mrb[0].mxu0
        %v1258 = vadd.f32 %v1178, %v1257
        %1259 = vdwg.mxu0
        %v1261 = vadd.f32 %v1256, %v223
        %v1262 = vadd.f32 %v1258, %v239
        %v1265 = vcombine.low %v1261, %v1262
        %1267 = vst [vmem:[%s217] sm:$0xff] %v1265
        %s1268 = sand.u32 %s137, 1
        %s1269 = scalar_lea.sflag [#allocation3], %s1268
        %s1270 = sand.u32 %s137, 1
        %s1271 = smul.addr %s1270, 8
        %s1272 = scalar_lea.vmem [#allocation2], %s1271
        // Predicated region
        $region41: #{tpu_custom_call.1} parent=39 // pred_check
          %p1273 = pneg %p147
        $region42: #{tpu_custom_call.1} parent=39 // pred_check_branch
          %1275 = sbr.rel (%p1273) target = $region44
        $region43: #{tpu_custom_call.1} parent=39 // pred_region
          %s1277 = ssub.s32 128, 128
          %1278 = vsyncadd %s1269, %s1277
          %s1279 = smul.addr %s19, 2
          %s1280 = smul.addr %s1279, 64
          %s1281 = scalar_lea.hbm %s5, %s1280
          %s1283 = sshll.u32 %s1272, 4
          %s1284 = int_to_ptr.vmem [resolvable:$true] %s1283
          %1286 = dma.vmem_to_hbm [thread:$0]  %s1284, 128, %s1281, %s1269
        $region44: #{tpu_custom_call.1} parent=39 // pred_fallthru
          _
      $region40: #{tpu_custom_call.1} parent=5 // pred_fallthru
        _
      %p1287 = scmp.le.s32.totalorder 2, %s14
      // Predicated region
      $region45: #{tpu_custom_call.1} parent=5 // pred_check
        %p1288 = pneg %p1287
      $region46: #{tpu_custom_call.1} parent=5 // pred_check_branch
        %1290 = sbr.rel (%p1288) target = $region48
      $region47: #{tpu_custom_call.1} parent=5 // pred_region
        %s1291 = ssub.s32 %s14, 2
        // Predicated region
        $region49: #{tpu_custom_call.1} parent=47 // pred_check
          %p1292 = pneg %p153
        $region50: #{tpu_custom_call.1} parent=47 // pred_check_branch
          %1294 = sbr.rel (%p1292) target = $region52
        $region51: #{tpu_custom_call.1} parent=47 // pred_region
          %s1295 = sand.u32 %s138, 1
          %s1296 = scalar_lea.sflag [#allocation3], %s1295
          %s1297 = sand.u32 %s138, 1
          %s1298 = smul.addr %s1297, 8
          %s1299 = scalar_lea.vmem [#allocation2], %s1298
          %1300 = dma.done %s1296, 128
        $region52: #{tpu_custom_call.1} parent=47 // pred_fallthru
          _
      $region48: #{tpu_custom_call.1} parent=5 // pred_fallthru
        _
    $region6: #{tpu_custom_call.1} parent=1 // loop_footer
      %s18 = sadd.s32 1, %s14
    $region7: #{tpu_custom_call.1} parent=1 // loop_footer_branch
      %13 = sbr.rel target = $region3
    $region8: #{tpu_custom_call.1} parent=1 // loop_exit
      _
    %1301 = vsyncpa [#allocation3], 1
    %s1302 = scalar_lea.sflag [#allocation3], 1
    %1303 = vsyncpa %s1302, 1

</llo_original>
